<compile_context>
chip_gen: v7x
topology: tpu7x:2x2x1
jax: 0.10.0
libtpu: 0.0.40
codegen_flags: <defaults>
</compile_context>

<pallas_src>
import functools
import math

import jax
import jax.numpy as jnp
from jax.experimental import pallas as pl
from jax.experimental.pallas import tpu as pltpu


# ----------------------------------------------------------------------------
# Kernel: per-sample scale broadcast over a lane-dense (rows, cols) block.
# ----------------------------------------------------------------------------
def _drop_path_kernel(scale_ref, x_ref, o_ref):
    # scale_ref: (block_rows, 1) float32 holding 0.0 or 1/keep_prob per sample.
    # Multiply in the input dtype (bf16-native on v6e/v7x; f32 stays f32).
    o_ref[...] = x_ref[...] * scale_ref[...].astype(x_ref.dtype)


# ----------------------------------------------------------------------------
# Per-generation block budget (bytes per x block; in + out double-buffered
# means ~4x this resident in VMEM).
# ----------------------------------------------------------------------------
def _block_budget_bytes():
    try:
        kind = jax.devices()[0].device_kind.lower()
    except Exception:
        kind = ""
    if "v5" in kind:
        return 3 << 20        # v5e: 16 MiB default scoped VMEM, slow HBM
    if "v6" in kind:
        return 5 << 20        # v6e: 128 MiB VMEM, ~1.4 TB/s HBM
    if "v7" in kind:
        return 7 << 20        # v7x: 64 MiB VMEM, ~3.2 TB/s HBM
    return 4 << 20            # unknown / CPU interpret: conservative


# ----------------------------------------------------------------------------
# Block-size selection: big, lane-dense blocks that hit the byte budget.
# ----------------------------------------------------------------------------
def _pick_blocks(B, L, itemsize, block_rows, block_cols, budget):
    sublane = max(8, 32 // max(1, itemsize))   # 8 (f32) / 16 (bf16) / 32 (i8)

    if L % 128 != 0:
        # Last block dim must equal L when L is not a multiple of 128; bound
        # the block bytes by shrinking block_rows instead.
        bc = L if block_cols is None else block_cols
        if block_rows is None:
            rows = budget // max(1, bc * itemsize)
            rows = max(sublane, (rows // sublane) * sublane)
            block_rows = B if B <= sublane else min(B, rows)
        # TODO(synk): a huge non-128-aligned L can still exceed the VMEM
        # budget here; pad L to a multiple of 128 on the host in that case.
        return block_rows, bc

    if block_rows is None and block_cols is None:
        # Start from the smallest legal row tile and grow columns (multiples
        # of 128) to the budget; if a whole row fits, grow rows instead.
        rows = B if B <= sublane else sublane
        cols = budget // max(1, rows * itemsize)
        cols = max(128, (cols // 128) * 128)
        if cols >= L:
            cols = L
            rows_budget = budget // max(1, cols * itemsize)
            rows_budget = (rows_budget // sublane) * sublane
            rows = min(B, max(rows, rows_budget))
        block_rows, block_cols = rows, min(L, cols)
    elif block_rows is None:
        rows = budget // max(1, block_cols * itemsize)
        rows = max(sublane, (rows // sublane) * sublane)
        block_rows = B if B <= sublane else min(B, rows)
    elif block_cols is None:
        cols = budget // max(1, block_rows * itemsize)
        cols = max(128, (cols // 128) * 128)
        block_cols = min(L, cols)
    return block_rows, block_cols


# ----------------------------------------------------------------------------
# Pallas wrapper
# ----------------------------------------------------------------------------
@functools.partial(jax.jit, static_argnames=("block_rows", "block_cols"))
def _drop_path_pallas(x, scale, *, block_rows=None, block_cols=None):
    orig_shape = x.shape
    B = x.shape[0]
    L = int(math.prod(x.shape[1:])) if x.ndim > 1 else 1
    x2 = x.reshape(B, L)

    block_rows, block_cols = _pick_blocks(
        B, L, jnp.dtype(x.dtype).itemsize, block_rows, block_cols,
        _block_budget_bytes())
    grid = (pl.cdiv(B, block_rows), pl.cdiv(L, block_cols))

    out = pl.pallas_call(
        _drop_path_kernel,
        out_shape=jax.ShapeDtypeStruct((B, L), x.dtype),
        grid=grid,
        in_specs=[
            pl.BlockSpec((block_rows, 1), lambda bi, lj: (bi, 0)),
            pl.BlockSpec((block_rows, block_cols), lambda bi, lj: (bi, lj)),
        ],
        out_specs=pl.BlockSpec((block_rows, block_cols),
                               lambda bi, lj: (bi, lj)),
        compiler_params=pltpu.CompilerParams(
            dimension_semantics=("parallel", "parallel"),
            vmem_limit_bytes=48 << 20),
    )(scale, x2)
    return out.reshape(orig_shape)


def drop_path(x, drop_prob=0.0, training=False, *, seed=0, rng_key=None,
              block_rows=None, block_cols=None, return_mask=False):
    """JAX/Pallas equivalent of the PyTorch drop_path function."""
    if drop_prob == 0.0 or not training:
        if return_mask:
            return x, jnp.ones((x.shape[0], 1), jnp.float32)
        return x
    keep_prob = 1.0 - float(drop_prob)

    if rng_key is None:
        rng_key = jax.random.PRNGKey(seed)
    B = x.shape[0]
    # Same construction as the reference: floor(keep_prob + U[0,1)).
    u = jax.random.uniform(rng_key, (B, 1), dtype=jnp.float32)
    mask = jnp.floor(jnp.float32(keep_prob) + u)          # 0.0 or 1.0
    scale = mask * jnp.float32(1.0 / keep_prob)           # 0 or 1/keep_prob

    out = _drop_path_pallas(x, scale, block_rows=block_rows,
                            block_cols=block_cols)
    return (out, mask) if return_mask else out


class DropPath:
    """Mirror of the PyTorch DropPath module (training flag is explicit)."""

    def __init__(self, drop_prob=None):
        self.drop_prob = drop_prob
        self.training = True

    def __call__(self, x, *, seed=0, rng_key=None):
        return drop_path(x, self.drop_prob or 0.0, self.training,
                         seed=seed, rng_key=rng_key)


# ----------------------------------------------------------------------------
# Self-test
# ----------------------------------------------------------------------------
if __name__ == "__main__":
    key = jax.random.PRNGKey(0)
    k1, k2 = jax.random.split(key)

    drop_prob = 0.25
    keep_prob = 1.0 - drop_prob

    # Small case: [B, seq, hidden] = [8, 16, 32]  (single-block grid).
    x = jax.random.normal(k1, (8, 16, 32), jnp.float32)
    out, mask = drop_path(x, drop_prob, training=True, seed=1234,
                          return_mask=True)
    out = jax.block_until_ready(out)
    assert out.shape == x.shape, out.shape
    assert bool(jnp.all((mask == 0.0) | (mask == 1.0)))
    expected = x * (mask.reshape(8, 1, 1) / keep_prob)
    assert bool(jnp.allclose(out, expected, rtol=1e-6, atol=1e-6))
    assert bool(jnp.all(jnp.isfinite(out)))

    # Identity paths (eval mode / drop_prob == 0): exactly the input.
    assert bool(jnp.array_equal(drop_path(x, drop_prob, training=False), x))
    assert bool(jnp.array_equal(drop_path(x, 0.0, training=True), x))

    # bf16 path: multiply happens natively in bf16 inside the kernel.
    xb = x.astype(jnp.bfloat16)
    outb, maskb = drop_path(xb, drop_prob, training=True, seed=1234,
                            return_mask=True)
    outb = jax.block_until_ready(outb)
    expb = xb * (maskb.reshape(8, 1, 1) / keep_prob).astype(jnp.bfloat16)
    assert bool(jnp.allclose(outb.astype(jnp.float32),
                             expb.astype(jnp.float32), rtol=2e-2, atol=2e-2))

    # Multi-block grid: mask must stay constant across column blocks of the
    # same sample (B=16, L=1536 -> grid (2, 12) with forced small blocks).
    x2 = jax.random.normal(k2, (16, 4, 384), jnp.float32)
    out2, mask2 = drop_path(x2, drop_prob, training=True, seed=7,
                            block_rows=8, block_cols=128, return_mask=True)
    out2 = jax.block_until_ready(out2)
    assert bool(jnp.all((mask2 == 0.0) | (mask2 == 1.0)))
    expected2 = x2 * (mask2.reshape(16, 1, 1) / keep_prob)
    assert bool(jnp.allclose(out2, expected2, rtol=1e-6, atol=1e-6))
    assert bool(jnp.all(jnp.isfinite(out2)))

    print("KERNEL_OK")
</pallas_src>

<mosaic_0001>
module attributes {stable_mosaic.version = 11 : i64} {
  func.func @_drop_path_kernel(%arg0: i32, %arg1: i32, %arg2: memref<8x1xf32, #tpu.memory_space<vmem>>, %arg3: memref<8x512xf32, #tpu.memory_space<vmem>>, %arg4: memref<8x512xf32, #tpu.memory_space<vmem>>) attributes {dimension_semantics = [#tpu.dimension_semantics<parallel>, #tpu.dimension_semantics<parallel>], iteration_bounds = array<i64: 1, 1>, scalar_prefetch = 0 : i64, scratch_operands = 0 : i64, tpu.core_type = #tpu.core_type<tc>, window_params = [{transform_indices = @transform_0, window_bounds = array<i64: 8, 1>}, {transform_indices = @transform_1, window_bounds = array<i64: 8, 512>}, {transform_indices = @transform_2, window_bounds = array<i64: 8, 512>}]} {
    %c0 = arith.constant 0 : index
    %c0_0 = arith.constant 0 : index
    %0 = vector.load %arg3[%c0, %c0_0] : memref<8x512xf32, #tpu.memory_space<vmem>>, vector<8x512xf32>
    %c0_1 = arith.constant 0 : index
    %c0_2 = arith.constant 0 : index
    %1 = vector.load %arg2[%c0_1, %c0_2] : memref<8x1xf32, #tpu.memory_space<vmem>>, vector<8x1xf32>
    %2 = vector.broadcast %1 : vector<8x1xf32> to vector<8x512xf32>
    %3 = arith.mulf %0, %2 : vector<8x512xf32>
    %c0_3 = arith.constant 0 : index
    %c0_4 = arith.constant 0 : index
    %4 = vector.load %arg4[%c0_3, %c0_4] : memref<8x512xf32, #tpu.memory_space<vmem>>, vector<8x512xf32>
    tpu.vector_store %arg4[%c0_3, %c0_4], %3 {strides = array<i32>} : memref<8x512xf32, #tpu.memory_space<vmem>>, vector<8x512xf32>,
    return
  }
  func.func @transform_0(%arg0: i32, %arg1: i32) -> (i32, i32) {
    %c0_i32 = arith.constant 0 : i32
    %c0_i32_0 = arith.constant 0 : i32
    return %arg0, %c0_i32 : i32, i32
  }
  func.func @transform_1(%arg0: i32, %arg1: i32) -> (i32, i32) {
    %c0_i32 = arith.constant 0 : i32
    return %arg0, %arg1 : i32, i32
  }
  func.func @transform_2(%arg0: i32, %arg1: i32) -> (i32, i32) {
    %c0_i32 = arith.constant 0 : i32
    return %arg0, %arg1 : i32, i32
  }
}

</mosaic_0001>

<llo_original>
// kernel: _drop_path_pallas.1
$region0: #{_drop_path_pallas.1}
  #allocation0 [shape = 'u32[]', space=smem, size = 0x4, offset = 0x4, fixed_abs, tag = 'smem constant byte address 0x4 - core index']
  #allocation1 [shape = 'u32[144,128]{1,0:T(1,128)}', space=vmem, size = 0x12000, scoped, tag = 'internal scratch']
  %s0 = inlined_call_operand.vmem [shape: f32[8,1], index: 0, kind: input, shape index: {}]
  %s1 = inlined_call_operand.vmem [shape: f32[8,512], index: 1, kind: input, shape index: {}]
  %s2 = inlined_call_operand.vmem [shape: f32[8,512], index: 2, kind: output, shape index: {}]
  %s3 = sld [smem:[#allocation0]]
  $region18: #{_drop_path_pallas.1} parent=0
    _
  %s5 = ssub.s32 1, %s3
  %s6 = scalar_select 0, %s5, %s3
  // Predicated region
  $region2: #{_drop_path_pallas.1} parent=0 // pred_check
    _
  $region3: #{_drop_path_pallas.1} parent=0 // pred_check_branch
    %8 = sbr.rel (0) target = $region5
  $region4: #{_drop_path_pallas.1} parent=0 // pred_region
    _
  $region5: #{_drop_path_pallas.1} parent=0 // pred_fallthru
    _
  // Predicated region
  $region6: #{_drop_path_pallas.1} parent=0 // pred_check
    _
  $region7: #{_drop_path_pallas.1} parent=0 // pred_check_branch
    %10 = sbr.rel (0) target = $region9
  $region8: #{_drop_path_pallas.1} parent=0 // pred_region
    _
  $region9: #{_drop_path_pallas.1} parent=0 // pred_fallthru
    _
  %v11 = vld [vmem:[%s1] sm:$0xff]
  %v12 = vld [vmem:[%s1 + $0x8] sm:$0xff]
  %v13 = vld [vmem:[%s1 + $0x10] sm:$0xff]
  %v14 = vld [vmem:[%s1 + $0x18] sm:$0xff]
  %v15 = vld [vmem:[%s0] sm:$0xff]
  %17 = vset.pattern.permute.xlu0 0
  %18 = vperm.xlu0 %17, %v15
  %v19 = vpop.permute.xlu0 %18
  %v21 = vmul.f32 %v11, %v19
  %v22 = vmul.f32 %v12, %v19
  %v23 = vmul.f32 %v13, %v19
  %v24 = vmul.f32 %v14, %v19
  %25 = vst [vmem:[%s2] sm:$0xff] %v21
  %26 = vst [vmem:[%s2 + $0x8] sm:$0xff] %v22
  %27 = vst [vmem:[%s2 + $0x10] sm:$0xff] %v23
  %28 = vst [vmem:[%s2 + $0x18] sm:$0xff] %v24
  // Predicated region
  $region10: #{_drop_path_pallas.1} parent=0 // pred_check
    _
  $region11: #{_drop_path_pallas.1} parent=0 // pred_check_branch
    %30 = sbr.rel (0) target = $region13
  $region12: #{_drop_path_pallas.1} parent=0 // pred_region
    _
  $region13: #{_drop_path_pallas.1} parent=0 // pred_fallthru
    _
  // Predicated region
  $region14: #{_drop_path_pallas.1} parent=0 // pred_check
    _
  $region15: #{_drop_path_pallas.1} parent=0 // pred_check_branch
    %32 = sbr.rel (0) target = $region17
  $region16: #{_drop_path_pallas.1} parent=0 // pred_region
    _
  $region17: #{_drop_path_pallas.1} parent=0 // pred_fallthru
    _

</llo_original>
